<compile_context>
chip_gen: v7x
topology: tpu7x:2x2x1
jax: 0.10.0
libtpu: 0.0.40
codegen_flags: <defaults>
</compile_context>

<pallas_src>
import jax
import jax.numpy as jnp
from jax.experimental import pallas as pl
from jax.experimental.pallas import tpu as pltpu


def _round_up(n, m):
    return ((n + m - 1) // m) * m


def _vae_kernel(
    x_ref, eps_ref,
    w1_ref, b1_ref,
    w2_ref, b2_ref,
    w3_ref, b3_ref,
    w4_ref, b4_ref,
    xrec_ref, mu_ref, logvar_ref,
):
    """One batch tile: x (TB, D_in) f32, eps (TB, L) f32."""
    L = eps_ref.shape[1]
    l_pad = w2_ref.shape[1] // 2          # column offset of the logvar half

    # in-kernel bf16 cast (VPU) -- avoids a wrapper-side pad/cast HBM pass
    x = x_ref[...].astype(jnp.bfloat16)   # (TB, D_in)
    eps = eps_ref[...]                    # (TB, L) f32

    # ---- encoder ----
    h1 = jnp.dot(x, w1_ref[...], preferred_element_type=jnp.float32) + b1_ref[...]
    h1 = jnp.maximum(h1, 0.0)                                   # ReLU (f32)

    # fused mu|logvar head: single (H_pad, 2*L_pad) MXU matmul
    h2 = jnp.dot(h1.astype(jnp.bfloat16), w2_ref[...],
                 preferred_element_type=jnp.float32) + b2_ref[...]
    mu = h2[:, :L]                        # live mu columns
    logvar = h2[:, l_pad:l_pad + L]       # live logvar columns (vreg-aligned)

    # ---- reparameterize: z = mu + eps * exp(0.5 * logvar)  (f32) ----
    z = mu + eps * jnp.exp(0.5 * logvar)

    # ---- decoder ----
    d1 = jnp.dot(z.astype(jnp.bfloat16), w3_ref[...],
                 preferred_element_type=jnp.float32) + b3_ref[...]
    d1 = jnp.maximum(d1, 0.0)                                   # ReLU (f32)
    xr = jnp.dot(d1.astype(jnp.bfloat16), w4_ref[...],
                 preferred_element_type=jnp.float32) + b4_ref[...]
    xr = jnp.tanh(xr)

    # narrow, live-column stores (no padded writeback)
    xrec_ref[...] = xr.astype(xrec_ref.dtype)
    mu_ref[...] = mu.astype(mu_ref.dtype)
    logvar_ref[...] = logvar.astype(logvar_ref.dtype)


def prepare_params(params):
    """Pad/cast weights ONCE (call at init, reuse across forward calls).

    Weights -> bf16, zero-padded on MXU-facing dims (exact: pads are zero).
    Biases stay f32, shaped (1, width) for in-kernel broadcast.
    """
    D_in, H = params["w1"].shape
    two_l = params["w2"].shape[1]
    L = two_l // 2

    H_pad = _round_up(H, 128)
    L_pad = _round_up(L, 128)

    def pad2(a, r, c):
        return jnp.pad(a, ((0, r - a.shape[0]), (0, c - a.shape[1])))

    def pad_bias(a, c):
        return jnp.pad(a.reshape(1, -1), ((0, 0), (0, c - a.shape[0])))

    w1 = pad2(params["w1"], D_in, H_pad).astype(jnp.bfloat16)        # (D_in, H_pad)
    b1 = pad_bias(params["b1"], H_pad)                               # (1, H_pad)

    # fused head: pad mu and logvar halves separately so the in-kernel
    # column split at L_pad is exact, then concat to (H_pad, 2*L_pad).
    w2, b2 = params["w2"], params["b2"]
    w2p = jnp.concatenate(
        [pad2(w2[:, :L], H_pad, L_pad), pad2(w2[:, L:], H_pad, L_pad)],
        axis=1).astype(jnp.bfloat16)                                 # (H_pad, 2*L_pad)
    b2p = jnp.concatenate([pad_bias(b2[:L], L_pad), pad_bias(b2[L:], L_pad)],
                          axis=1)                                    # (1, 2*L_pad)

    w3 = pad2(params["w3"], L, H_pad).astype(jnp.bfloat16)           # (L, H_pad)
    b3 = pad_bias(params["b3"], H_pad)                               # (1, H_pad)
    w4 = pad2(params["w4"], H_pad, D_in).astype(jnp.bfloat16)        # (H_pad, D_in)
    b4 = params["b4"].reshape(1, -1).astype(jnp.float32)             # (1, D_in)

    prepared = {"w1": w1, "b1": b1, "w2": w2p, "b2": b2p,
                "w3": w3, "b3": b3, "w4": w4, "b4": b4}
    return jax.device_put(prepared)


def vae_forward(x, eps, prepared, tb=None):
    """x: (B, D_in) f32, eps: (B, L) f32, prepared: output of prepare_params."""
    B, D_in = x.shape
    L = eps.shape[1]
    H_pad = prepared["w1"].shape[1]
    head_n = prepared["w2"].shape[1]          # 2 * L_pad

    # Batch tile: multiple of 8 (f32 sublane), >= 2 grid steps when B allows
    # (keeps both v7x TensorCores busy), capped at 512 rows per tile.
    if tb is None:
        tb = min(512, _round_up(max((B + 1) // 2, 8), 8))
    tb = max(8, _round_up(tb, 8))
    B_pad = _round_up(B, tb)

    if B_pad != B:
        x = jnp.pad(x, ((0, B_pad - B), (0, 0)))
        eps = jnp.pad(eps, ((0, B_pad - B), (0, 0)))

    grid = (B_pad // tb,)

    def row_spec(c):          # activation / output tiles over the batch
        return pl.BlockSpec((tb, c), lambda i: (i, 0))

    def const_spec(r, c):     # weights/biases: same block every step (resident)
        return pl.BlockSpec((r, c), lambda i: (0, 0))

    # Right-size the scoped VMEM limit from the real footprint (tiles are
    # double-buffered; leave generous headroom; cap at 40 MiB for v7x).
    tile_bytes = 2 * tb * 4 * (D_in + L + D_in + 2 * L)
    weight_bytes = 2 * 2 * (prepared["w1"].size + prepared["w2"].size
                            + prepared["w3"].size + prepared["w4"].size)
    bias_bytes = 2 * 4 * (H_pad + head_n + H_pad + D_in)
    interm_bytes = tb * 4 * (H_pad + head_n + H_pad + D_in)
    vmem_limit = int(min(40 * 1024 * 1024,
                         max(8 * 1024 * 1024,
                             2 * (tile_bytes + weight_bytes + bias_bytes
                                  + interm_bytes))))

    out_shapes = (
        jax.ShapeDtypeStruct((B_pad, D_in), jnp.float32),   # x_recon
        jax.ShapeDtypeStruct((B_pad, L), jnp.float32),      # mu
        jax.ShapeDtypeStruct((B_pad, L), jnp.float32),      # logvar
    )

    x_recon, mu, logvar = pl.pallas_call(
        _vae_kernel,
        out_shape=out_shapes,
        grid=grid,
        in_specs=[
            row_spec(D_in),                 # x (f32, cast in kernel)
            row_spec(L),                    # eps
            const_spec(D_in, H_pad),        # w1
            const_spec(1, H_pad),           # b1
            const_spec(H_pad, head_n),      # w2 (fused mu|logvar head)
            const_spec(1, head_n),          # b2
            const_spec(L, H_pad),           # w3
            const_spec(1, H_pad),           # b3
            const_spec(H_pad, D_in),        # w4
            const_spec(1, D_in),            # b4
        ],
        out_specs=(row_spec(D_in), row_spec(L), row_spec(L)),
        compiler_params=pltpu.CompilerParams(
            dimension_semantics=("parallel",),
            vmem_limit_bytes=vmem_limit,
        ),
    )(x, eps,
      prepared["w1"], prepared["b1"], prepared["w2"], prepared["b2"],
      prepared["w3"], prepared["b3"], prepared["w4"], prepared["b4"])

    if B_pad != B:
        x_recon, mu, logvar = x_recon[:B], mu[:B], logvar[:B]
    return x_recon, mu, logvar


def init_params(key, input_dim, latent_dim, hidden=128):
    """Deterministic init mirroring PyTorch nn.Linear default U(-1/sqrt(fan_in), .)."""
    ks = jax.random.split(key, 8)

    def lin(kw, kb, fan_in, fan_out):
        bound = 1.0 / jnp.sqrt(fan_in)
        w = jax.random.uniform(kw, (fan_in, fan_out), jnp.float32, -bound, bound)
        b = jax.random.uniform(kb, (fan_out,), jnp.float32, -bound, bound)
        return w, b

    w1, b1 = lin(ks[0], ks[1], input_dim, hidden)
    w2, b2 = lin(ks[2], ks[3], hidden, latent_dim * 2)
    w3, b3 = lin(ks[4], ks[5], latent_dim, hidden)
    w4, b4 = lin(ks[6], ks[7], hidden, input_dim)
    return {"w1": w1, "b1": b1, "w2": w2, "b2": b2,
            "w3": w3, "b3": b3, "w4": w4, "b4": b4}


def vae_forward_ref(x, eps, params):
    """Pure-JAX f32 reference for correctness checking."""
    L = eps.shape[1]
    h1 = jnp.maximum(x @ params["w1"] + params["b1"], 0.0)
    h2 = h1 @ params["w2"] + params["b2"]
    mu, logvar = h2[:, :L], h2[:, L:]
    z = mu + eps * jnp.exp(0.5 * logvar)
    d1 = jnp.maximum(z @ params["w3"] + params["b3"], 0.0)
    x_recon = jnp.tanh(d1 @ params["w4"] + params["b4"])
    return x_recon, mu, logvar


if __name__ == "__main__":
    B, input_dim, latent_dim = 8, 32, 8

    key = jax.random.PRNGKey(0)
    k_params, k_x, k_eps = jax.random.split(key, 3)

    params = init_params(k_params, input_dim, latent_dim)
    prepared = prepare_params(params)          # pad/cast weights once
    x = jax.random.normal(k_x, (B, input_dim), jnp.float32)
    eps = jax.random.normal(k_eps, (B, latent_dim), jnp.float32)

    x_recon, mu, logvar = vae_forward(x, eps, prepared)
    jax.block_until_ready((x_recon, mu, logvar))

    # sanity check against pure-JAX reference (tolerance loosened for the
    # bf16 MXU operands with f32 accumulation)
    xr_ref, mu_ref, lv_ref = vae_forward_ref(x, eps, params)
    assert jnp.allclose(x_recon, xr_ref, atol=5e-2, rtol=5e-2), "x_recon mismatch"
    assert jnp.allclose(mu, mu_ref, atol=5e-2, rtol=5e-2), "mu mismatch"
    assert jnp.allclose(logvar, lv_ref, atol=5e-2, rtol=5e-2), "logvar mismatch"

    print("KERNEL_OK")
</pallas_src>

<mosaic_0001>
module attributes {stable_mosaic.version = 11 : i64} {
  func.func @_vae_kernel(%arg0: i32, %arg1: memref<8x32xf32, #tpu.memory_space<vmem>>, %arg2: memref<8x8xf32, #tpu.memory_space<vmem>>, %arg3: memref<32x128xbf16, #tpu.memory_space<vmem>>, %arg4: memref<1x128xf32, #tpu.memory_space<vmem>>, %arg5: memref<128x256xbf16, #tpu.memory_space<vmem>>, %arg6: memref<1x256xf32, #tpu.memory_space<vmem>>, %arg7: memref<8x128xbf16, #tpu.memory_space<vmem>>, %arg8: memref<1x128xf32, #tpu.memory_space<vmem>>, %arg9: memref<128x32xbf16, #tpu.memory_space<vmem>>, %arg10: memref<1x32xf32, #tpu.memory_space<vmem>>, %arg11: memref<8x32xf32, #tpu.memory_space<vmem>>, %arg12: memref<8x8xf32, #tpu.memory_space<vmem>>, %arg13: memref<8x8xf32, #tpu.memory_space<vmem>>) attributes {dimension_semantics = [#tpu.dimension_semantics<parallel>], iteration_bounds = array<i64: 1>, scalar_prefetch = 0 : i64, scratch_operands = 0 : i64, tpu.core_type = #tpu.core_type<tc>, window_params = [{transform_indices = @transform_0, window_bounds = array<i64: 8, 32>}, {transform_indices = @transform_1, window_bounds = array<i64: 8, 8>}, {pipeline_mode = #tpu.pipeline_mode<synchronous>, transform_indices = @transform_2, window_bounds = array<i64: 32, 128>}, {pipeline_mode = #tpu.pipeline_mode<synchronous>, transform_indices = @transform_3, window_bounds = array<i64: 1, 128>}, {pipeline_mode = #tpu.pipeline_mode<synchronous>, transform_indices = @transform_4, window_bounds = array<i64: 128, 256>}, {pipeline_mode = #tpu.pipeline_mode<synchronous>, transform_indices = @transform_5, window_bounds = array<i64: 1, 256>}, {pipeline_mode = #tpu.pipeline_mode<synchronous>, transform_indices = @transform_6, window_bounds = array<i64: 8, 128>}, {pipeline_mode = #tpu.pipeline_mode<synchronous>, transform_indices = @transform_7, window_bounds = array<i64: 1, 128>}, {pipeline_mode = #tpu.pipeline_mode<synchronous>, transform_indices = @transform_8, window_bounds = array<i64: 128, 32>}, {pipeline_mode = #tpu.pipeline_mode<synchronous>, transform_indices = @transform_9, window_bounds = array<i64: 1, 32>}, {transform_indices = @transform_10, window_bounds = array<i64: 8, 32>}, {transform_indices = @transform_11, window_bounds = array<i64: 8, 8>}, {transform_indices = @transform_12, window_bounds = array<i64: 8, 8>}]} {
    %c0 = arith.constant 0 : index
    %c0_0 = arith.constant 0 : index
    %0 = vector.load %arg1[%c0, %c0_0] : memref<8x32xf32, #tpu.memory_space<vmem>>, vector<8x32xf32>
    %1 = arith.truncf %0 : vector<8x32xf32> to vector<8x32xbf16>
    %c0_1 = arith.constant 0 : index
    %c0_2 = arith.constant 0 : index
    %2 = vector.load %arg2[%c0_1, %c0_2] : memref<8x8xf32, #tpu.memory_space<vmem>>, vector<8x8xf32>
    %c0_3 = arith.constant 0 : index
    %c0_4 = arith.constant 0 : index
    %3 = vector.load %arg3[%c0_3, %c0_4] : memref<32x128xbf16, #tpu.memory_space<vmem>>, vector<32x128xbf16>
    %cst = arith.constant dense<0.000000e+00> : vector<8x128xf32>
    %4 = tpu.matmul %1, %3, %cst {dimension_numbers = #tpu.dot_dimension_numbers<[1], [0], [0], [1], [0, 0, 1, 1], [], []>} : vector<8x32xbf16>, vector<32x128xbf16>, vector<8x128xf32> -> vector<8x128xf32>
    %c0_5 = arith.constant 0 : index
    %c0_6 = arith.constant 0 : index
    %5 = vector.load %arg4[%c0_5, %c0_6] : memref<1x128xf32, #tpu.memory_space<vmem>>, vector<1x128xf32>
    %6 = vector.broadcast %5 : vector<1x128xf32> to vector<8x128xf32>
    %7 = arith.addf %4, %6 : vector<8x128xf32>
    %cst_7 = arith.constant 0.000000e+00 : f32
    %8 = vector.broadcast %cst_7 : f32 to vector<8x128xf32>
    %9 = arith.maximumf %7, %8 : vector<8x128xf32>
    %10 = arith.truncf %9 : vector<8x128xf32> to vector<8x128xbf16>
    %c0_8 = arith.constant 0 : index
    %c0_9 = arith.constant 0 : index
    %11 = vector.load %arg5[%c0_8, %c0_9] : memref<128x256xbf16, #tpu.memory_space<vmem>>, vector<128x256xbf16>
    %cst_10 = arith.constant dense<0.000000e+00> : vector<8x256xf32>
    %12 = tpu.matmul %10, %11, %cst_10 {dimension_numbers = #tpu.dot_dimension_numbers<[1], [0], [0], [1], [0, 0, 1, 1], [], []>} : vector<8x128xbf16>, vector<128x256xbf16>, vector<8x256xf32> -> vector<8x256xf32>
    %c0_11 = arith.constant 0 : index
    %c0_12 = arith.constant 0 : index
    %13 = vector.load %arg6[%c0_11, %c0_12] : memref<1x256xf32, #tpu.memory_space<vmem>>, vector<1x256xf32>
    %14 = vector.broadcast %13 : vector<1x256xf32> to vector<8x256xf32>
    %15 = arith.addf %12, %14 : vector<8x256xf32>
    %16 = vector.extract_strided_slice %15 {offsets = [0, 0], sizes = [8, 8], strides = [1, 1]} : vector<8x256xf32> to vector<8x8xf32>
    %17 = vector.extract_strided_slice %15 {offsets = [0, 128], sizes = [8, 8], strides = [1, 1]} : vector<8x256xf32> to vector<8x8xf32>
    %cst_13 = arith.constant 5.000000e-01 : f32
    %18 = vector.broadcast %cst_13 : f32 to vector<8x8xf32>
    %19 = arith.mulf %18, %17 : vector<8x8xf32>
    %20 = math.exp %19 : vector<8x8xf32>
    %21 = arith.mulf %2, %20 : vector<8x8xf32>
    %22 = arith.addf %16, %21 : vector<8x8xf32>
    %23 = arith.truncf %22 : vector<8x8xf32> to vector<8x8xbf16>
    %c0_14 = arith.constant 0 : index
    %c0_15 = arith.constant 0 : index
    %24 = vector.load %arg7[%c0_14, %c0_15] : memref<8x128xbf16, #tpu.memory_space<vmem>>, vector<8x128xbf16>
    %cst_16 = arith.constant dense<0.000000e+00> : vector<8x128xf32>
    %25 = tpu.matmul %23, %24, %cst_16 {dimension_numbers = #tpu.dot_dimension_numbers<[1], [0], [0], [1], [0, 0, 1, 1], [], []>} : vector<8x8xbf16>, vector<8x128xbf16>, vector<8x128xf32> -> vector<8x128xf32>
    %c0_17 = arith.constant 0 : index
    %c0_18 = arith.constant 0 : index
    %26 = vector.load %arg8[%c0_17, %c0_18] : memref<1x128xf32, #tpu.memory_space<vmem>>, vector<1x128xf32>
    %27 = vector.broadcast %26 : vector<1x128xf32> to vector<8x128xf32>
    %28 = arith.addf %25, %27 : vector<8x128xf32>
    %cst_19 = arith.constant 0.000000e+00 : f32
    %29 = vector.broadcast %cst_19 : f32 to vector<8x128xf32>
    %30 = arith.maximumf %28, %29 : vector<8x128xf32>
    %31 = arith.truncf %30 : vector<8x128xf32> to vector<8x128xbf16>
    %c0_20 = arith.constant 0 : index
    %c0_21 = arith.constant 0 : index
    %32 = vector.load %arg9[%c0_20, %c0_21] : memref<128x32xbf16, #tpu.memory_space<vmem>>, vector<128x32xbf16>
    %cst_22 = arith.constant dense<0.000000e+00> : vector<8x32xf32>
    %33 = tpu.matmul %31, %32, %cst_22 {dimension_numbers = #tpu.dot_dimension_numbers<[1], [0], [0], [1], [0, 0, 1, 1], [], []>} : vector<8x128xbf16>, vector<128x32xbf16>, vector<8x32xf32> -> vector<8x32xf32>
    %c0_23 = arith.constant 0 : index
    %c0_24 = arith.constant 0 : index
    %34 = vector.load %arg10[%c0_23, %c0_24] : memref<1x32xf32, #tpu.memory_space<vmem>>, vector<1x32xf32>
    %35 = vector.broadcast %34 : vector<1x32xf32> to vector<8x32xf32>
    %36 = arith.addf %33, %35 : vector<8x32xf32>
    %37 = math.tanh %36 : vector<8x32xf32>
    %c0_25 = arith.constant 0 : index
    %c0_26 = arith.constant 0 : index
    %38 = vector.load %arg11[%c0_25, %c0_26] : memref<8x32xf32, #tpu.memory_space<vmem>>, vector<8x32xf32>
    tpu.vector_store %arg11[%c0_25, %c0_26], %37 {strides = array<i32>} : memref<8x32xf32, #tpu.memory_space<vmem>>, vector<8x32xf32>,
    %c0_27 = arith.constant 0 : index
    %c0_28 = arith.constant 0 : index
    %39 = vector.load %arg12[%c0_27, %c0_28] : memref<8x8xf32, #tpu.memory_space<vmem>>, vector<8x8xf32>
    tpu.vector_store %arg12[%c0_27, %c0_28], %16 {strides = array<i32>} : memref<8x8xf32, #tpu.memory_space<vmem>>, vector<8x8xf32>,
    %c0_29 = arith.constant 0 : index
    %c0_30 = arith.constant 0 : index
    %40 = vector.load %arg13[%c0_29, %c0_30] : memref<8x8xf32, #tpu.memory_space<vmem>>, vector<8x8xf32>
    tpu.vector_store %arg13[%c0_29, %c0_30], %17 {strides = array<i32>} : memref<8x8xf32, #tpu.memory_space<vmem>>, vector<8x8xf32>,
    return
  }
  func.func @transform_0(%arg0: i32) -> (i32, i32) {
    %c0_i32 = arith.constant 0 : i32
    %c0_i32_0 = arith.constant 0 : i32
    return %arg0, %c0_i32 : i32, i32
  }
  func.func @transform_1(%arg0: i32) -> (i32, i32) {
    %c0_i32 = arith.constant 0 : i32
    %c0_i32_0 = arith.constant 0 : i32
    return %arg0, %c0_i32 : i32, i32
  }
  func.func @transform_2(%arg0: i32) -> (i32, i32) {
    %c0_i32 = arith.constant 0 : i32
    %c0_i32_0 = arith.constant 0 : i32
    %c0_i32_1 = arith.constant 0 : i32
    return %c0_i32, %c0_i32_0 : i32, i32
  }
  func.func @transform_3(%arg0: i32) -> (i32, i32) {
    %c0_i32 = arith.constant 0 : i32
    %c0_i32_0 = arith.constant 0 : i32
    %c0_i32_1 = arith.constant 0 : i32
    return %c0_i32, %c0_i32_0 : i32, i32
  }
  func.func @transform_4(%arg0: i32) -> (i32, i32) {
    %c0_i32 = arith.constant 0 : i32
    %c0_i32_0 = arith.constant 0 : i32
    %c0_i32_1 = arith.constant 0 : i32
    return %c0_i32, %c0_i32_0 : i32, i32
  }
  func.func @transform_5(%arg0: i32) -> (i32, i32) {
    %c0_i32 = arith.constant 0 : i32
    %c0_i32_0 = arith.constant 0 : i32
    %c0_i32_1 = arith.constant 0 : i32
    return %c0_i32, %c0_i32_0 : i32, i32
  }
  func.func @transform_6(%arg0: i32) -> (i32, i32) {
    %c0_i32 = arith.constant 0 : i32
    %c0_i32_0 = arith.constant 0 : i32
    %c0_i32_1 = arith.constant 0 : i32
    return %c0_i32, %c0_i32_0 : i32, i32
  }
  func.func @transform_7(%arg0: i32) -> (i32, i32) {
    %c0_i32 = arith.constant 0 : i32
    %c0_i32_0 = arith.constant 0 : i32
    %c0_i32_1 = arith.constant 0 : i32
    return %c0_i32, %c0_i32_0 : i32, i32
  }
  func.func @transform_8(%arg0: i32) -> (i32, i32) {
    %c0_i32 = arith.constant 0 : i32
    %c0_i32_0 = arith.constant 0 : i32
    %c0_i32_1 = arith.constant 0 : i32
    return %c0_i32, %c0_i32_0 : i32, i32
  }
  func.func @transform_9(%arg0: i32) -> (i32, i32) {
    %c0_i32 = arith.constant 0 : i32
    %c0_i32_0 = arith.constant 0 : i32
    %c0_i32_1 = arith.constant 0 : i32
    return %c0_i32, %c0_i32_0 : i32, i32
  }
  func.func @transform_10(%arg0: i32) -> (i32, i32) {
    %c0_i32 = arith.constant 0 : i32
    %c0_i32_0 = arith.constant 0 : i32
    return %arg0, %c0_i32 : i32, i32
  }
  func.func @transform_11(%arg0: i32) -> (i32, i32) {
    %c0_i32 = arith.constant 0 : i32
    %c0_i32_0 = arith.constant 0 : i32
    return %arg0, %c0_i32 : i32, i32
  }
  func.func @transform_12(%arg0: i32) -> (i32, i32) {
    %c0_i32 = arith.constant 0 : i32
    %c0_i32_0 = arith.constant 0 : i32
    return %arg0, %c0_i32 : i32, i32
  }
}

</mosaic_0001>

<llo_original>
// kernel: tpu_custom_call.1
$region0: #{tpu_custom_call.1}
  #allocation0 [shape = 'u32[]', space=smem, size = 0x4, offset = 0x4, fixed_abs, tag = 'smem constant byte address 0x4 - core index']
  #allocation1 [shape = 'u32[144,128]{1,0:T(1,128)}', space=vmem, size = 0x12000, scoped, tag = 'internal scratch']
  %s0 = inlined_call_operand.vmem [shape: f32[8,32], index: 0, kind: input, shape index: {}]
  %s1 = inlined_call_operand.vmem [shape: f32[8,8], index: 1, kind: input, shape index: {}]
  %s2 = inlined_call_operand.vmem [shape: bf16[32,128], index: 2, kind: input, shape index: {}]
  %s3 = inlined_call_operand.vmem [shape: f32[1,128], index: 3, kind: input, shape index: {}]
  %s4 = inlined_call_operand.hbm [shape: bf16[128,256], index: 4, kind: input, shape index: {}]
  %s5 = inlined_call_operand.vmem [shape: f32[1,256], index: 5, kind: input, shape index: {}]
  %s6 = inlined_call_operand.vmem [shape: bf16[8,128], index: 6, kind: input, shape index: {}]
  %s7 = inlined_call_operand.vmem [shape: f32[1,128], index: 7, kind: input, shape index: {}]
  %s8 = inlined_call_operand.vmem [shape: bf16[128,32], index: 8, kind: input, shape index: {}]
  %s9 = inlined_call_operand.vmem [shape: f32[1,32], index: 9, kind: input, shape index: {}]
  %s10 = inlined_call_operand.hbm [shape: f32[8,32], index: 10, kind: output, shape index: {0}]
  %s11 = inlined_call_operand.hbm [shape: f32[8,8], index: 11, kind: output, shape index: {1}]
  %s12 = inlined_call_operand.hbm [shape: f32[8,8], index: 12, kind: output, shape index: {2}]
  %13 = xla_tuple %s10, %s11, %s12
  %s14 = sld [smem:[#allocation0]]
  $region70: #{tpu_custom_call.1} parent=0
    _
  %s16 = ssub.s32 1, %s14
  %s17 = scalar_select 0, %s16, %s14
  $region1: #{tpu_custom_call.1} parent=0
    #allocation2 [shape = 'u8[65536]{0}', space=vmem, size = 0x10000, scoped, tag = 'input window, operand 4, single buffered']
    #allocation3 [shape = 's32[1]{0}', space=sflag, size = 0x4, scoped, tag = 'scoped memory for tpu_custom_call.1']
    #allocation4 [shape = 's32[1]{0}', space=sflag, size = 0x4, scoped, tag = 'scoped memory for tpu_custom_call.1']
    #allocation5 [shape = 'u8[4096]{0}', space=vmem, size = 0x1000, scoped, tag = 'output window, operand 0, single buffered']
    #allocation6 [shape = 'u8[4096]{0}', space=vmem, size = 0x1000, scoped, tag = 'output window, operand 1, single buffered']
    #allocation7 [shape = 's32[1]{0}', space=sflag, size = 0x4, scoped, tag = 'scoped memory for tpu_custom_call.1']
    #allocation8 [shape = 'u8[4096]{0}', space=vmem, size = 0x1000, scoped, tag = 'output window, operand 2, single buffered']
    %18 = vsyncpa [#allocation3], 0
    %19 = vsyncpa [#allocation4], 0
    %20 = vsyncpa [#allocation7], 0
    // Predicated region
    $region2: #{tpu_custom_call.1} parent=1 // pred_check
      _
    $region3: #{tpu_custom_call.1} parent=1 // pred_check_branch
      %22 = sbr.rel (0) target = $region5
    $region4: #{tpu_custom_call.1} parent=1 // pred_region
      _
    $region5: #{tpu_custom_call.1} parent=1 // pred_fallthru
      _
    // Predicated region
    $region6: #{tpu_custom_call.1} parent=1 // pred_check
      _
    $region7: #{tpu_custom_call.1} parent=1 // pred_check_branch
      %24 = sbr.rel (0) target = $region9
    $region8: #{tpu_custom_call.1} parent=1 // pred_region
      _
    $region9: #{tpu_custom_call.1} parent=1 // pred_fallthru
      _
    // Predicated region
    $region10: #{tpu_custom_call.1} parent=1 // pred_check
      _
    $region11: #{tpu_custom_call.1} parent=1 // pred_check_branch
      %26 = sbr.rel (0) target = $region13
    $region12: #{tpu_custom_call.1} parent=1 // pred_region
      _
    $region13: #{tpu_custom_call.1} parent=1 // pred_fallthru
      _
    // Predicated region
    $region14: #{tpu_custom_call.1} parent=1 // pred_check
      _
    $region15: #{tpu_custom_call.1} parent=1 // pred_check_branch
      %28 = sbr.rel (0) target = $region17
    $region16: #{tpu_custom_call.1} parent=1 // pred_region
      _
    $region17: #{tpu_custom_call.1} parent=1 // pred_fallthru
      _
    // Predicated region
    $region18: #{tpu_custom_call.1} parent=1 // pred_check
      _
    $region19: #{tpu_custom_call.1} parent=1 // pred_check_branch
      %30 = sbr.rel (0) target = $region21
    $region20: #{tpu_custom_call.1} parent=1 // pred_region
      %s32 = ssub.s32 2048, 2048
      %33 = vsyncadd [#allocation3], %s32
      %s34 = sshll.u32 [#allocation2], 4
      %s35 = int_to_ptr.vmem [resolvable:$true] %s34
      %40 = dma.hbm_to_vmem [thread:$0]  %s4, 2048, %s35, [#allocation3], 128, 128, 8
    $region21: #{tpu_custom_call.1} parent=1 // pred_fallthru
      _
    // Predicated region
    $region22: #{tpu_custom_call.1} parent=1 // pred_check
      _
    $region23: #{tpu_custom_call.1} parent=1 // pred_check_branch
      %42 = sbr.rel (0) target = $region25
    $region24: #{tpu_custom_call.1} parent=1 // pred_region
      _
    $region25: #{tpu_custom_call.1} parent=1 // pred_fallthru
      _
    // Predicated region
    $region26: #{tpu_custom_call.1} parent=1 // pred_check
      _
    $region27: #{tpu_custom_call.1} parent=1 // pred_check_branch
      %44 = sbr.rel (0) target = $region29
    $region28: #{tpu_custom_call.1} parent=1 // pred_region
      _
    $region29: #{tpu_custom_call.1} parent=1 // pred_fallthru
      _
    // Predicated region
    $region30: #{tpu_custom_call.1} parent=1 // pred_check
      _
    $region31: #{tpu_custom_call.1} parent=1 // pred_check_branch
      %46 = sbr.rel (0) target = $region33
    $region32: #{tpu_custom_call.1} parent=1 // pred_region
      _
    $region33: #{tpu_custom_call.1} parent=1 // pred_fallthru
      _
    // Predicated region
    $region34: #{tpu_custom_call.1} parent=1 // pred_check
      _
    $region35: #{tpu_custom_call.1} parent=1 // pred_check_branch
      %48 = sbr.rel (0) target = $region37
    $region36: #{tpu_custom_call.1} parent=1 // pred_region
      _
    $region37: #{tpu_custom_call.1} parent=1 // pred_fallthru
      _
    // Predicated region
    $region38: #{tpu_custom_call.1} parent=1 // pred_check
      _
    $region39: #{tpu_custom_call.1} parent=1 // pred_check_branch
      %50 = sbr.rel (0) target = $region41
    $region40: #{tpu_custom_call.1} parent=1 // pred_region
      _
    $region41: #{tpu_custom_call.1} parent=1 // pred_fallthru
      _
    // Predicated region
    $region42: #{tpu_custom_call.1} parent=1 // pred_check
      _
    $region43: #{tpu_custom_call.1} parent=1 // pred_check_branch
      %52 = sbr.rel (0) target = $region45
    $region44: #{tpu_custom_call.1} parent=1 // pred_region
      %53 = dma.done [#allocation3], 2048
    $region45: #{tpu_custom_call.1} parent=1 // pred_fallthru
      _
    %v55 = vld [vmem:[%s0] sm:$0xff]
    %v56 = vpack.c.bf16 %v55, %v55
    %v57 = vld [vmem:[%s1] sm:$0xff]
    %v58 = vld [vmem:[%s2] sm:$0xf]
    %v59 = vld [vmem:[%s2 + $0x4] sm:$0xf]
    %v60 = vld [vmem:[%s2 + $0x8] sm:$0xf]
    %v61 = vld [vmem:[%s2 + $0xc] sm:$0xf]
    %v62 = vld [vmem:[%s3] sm:$0x1]
    %v64 = vlaneseq
    %v65 = vshrl.u32 %v64, 7
    %v66 = vsub.s32 0, %v65
    %v67 = vrot.slane %v62, %v66
    %v73 = vunpack.c.l.b16 %v58
    %v74 = vunpack.c.l.b16 %v59
    %v75 = vunpack.c.l.b16 %v60
    %v76 = vunpack.c.l.b16 %v61
    %v77 = vpack.c.b16 %v74, %v73
    %v78 = vpack.c.b16 %v76, %v75
    %vm81 = vcmask 261120
    %v83 = vsel %vm81, %v56, 0
    %85 = vmatprep.subr.bf16.mxu0 0
    %86 = vmatpush1.bf16.msra.mxu0 %v77
    %87 = vmatprep.subr.bf16.mxu0 0
    %88 = vmatpush1.bf16.msra.mxu0 %v78
    %89 = vmatprep.subr.bf16.mxu0 0
    %90 = vmatpush1.bf16.msra.mxu0 0
    %91 = vmatprep.subr.bf16.mxu0 0
    %92 = vmatpush1.bf16.msra.mxu0 0
    %93 = vmatprep.subr.bf16.mxu0 0
    %94 = vmatpush1.bf16.msra.mxu0 0
    %95 = vmatprep.subr.bf16.mxu0 0
    %96 = vmatpush1.bf16.msra.mxu0 0
    %97 = vmatprep.subr.bf16.mxu0 0
    %98 = vmatpush1.bf16.msra.mxu0 0
    %99 = vmatprep.subr.bf16.mxu0 0
    %100 = vmatpush1.bf16.msra.mxu0 0
    %101 = vmatprep.subr.bf16.mxu0 0
    %102 = vmatpush1.bf16.msra.mxu0 0
    %103 = vmatprep.subr.bf16.mxu0 0
    %104 = vmatpush1.bf16.msra.mxu0 0
    %105 = vmatprep.subr.bf16.mxu0 0
    %106 = vmatpush1.bf16.msra.mxu0 0
    %107 = vmatprep.subr.bf16.mxu0 0
    %108 = vmatpush1.bf16.msra.mxu0 0
    %109 = vmatprep.subr.bf16.mxu0 0
    %110 = vmatpush1.bf16.msra.mxu0 0
    %111 = vmatprep.subr.bf16.mxu0 0
    %112 = vmatpush1.bf16.msra.mxu0 0
    %113 = vmatprep.subr.bf16.mxu0 0
    %114 = vmatpush1.bf16.msra.mxu0 0
    %115 = vmatprep.subr.bf16.mxu0 0
    %116 = vmatpush1.bf16.msra.mxu0 0
    %117 = vmatprep.mubr.bf16.mxu0 0
    %118 = vmatmul.mubr.bf16.gmra.mrb[0].mxu0 %v83
    %v119 = vpop.f32.mrb[0].mxu0
    %v120 = vadd.f32 %v67, %v119
    %v121 = vpop.f32.mrb[0].mxu0
    %v122 = vpop.f32.mrb[0].mxu0
    %v123 = vpop.f32.mrb[0].mxu0
    %124 = vdwg.mxu0
    %v125 = vmax.f32 %v120, 0.0
    %v126 = vpack.c.bf16 %v125, %v125
    %v127 = vld [vmem:[#allocation2] sm:$0xff]
    %v128 = vld [vmem:[#allocation2 + $0x8] sm:$0xff]
    %v129 = vld [vmem:[#allocation2 + $0x10] sm:$0xff]
    %v130 = vld [vmem:[#allocation2 + $0x18] sm:$0xff]
    %v131 = vld [vmem:[#allocation2 + $0x20] sm:$0xff]
    %v132 = vld [vmem:[#allocation2 + $0x28] sm:$0xff]
    %v133 = vld [vmem:[#allocation2 + $0x30] sm:$0xff]
    %v134 = vld [vmem:[#allocation2 + $0x38] sm:$0xff]
    %v135 = vld [vmem:[#allocation2 + $0x40] sm:$0xff]
    %v136 = vld [vmem:[#allocation2 + $0x48] sm:$0xff]
    %v137 = vld [vmem:[#allocation2 + $0x50] sm:$0xff]
    %v138 = vld [vmem:[#allocation2 + $0x58] sm:$0xff]
    %v139 = vld [vmem:[#allocation2 + $0x60] sm:$0xff]
    %v140 = vld [vmem:[#allocation2 + $0x68] sm:$0xff]
    %v141 = vld [vmem:[#allocation2 + $0x70] sm:$0xff]
    %v142 = vld [vmem:[#allocation2 + $0x78] sm:$0xff]
    %v143 = vld [vmem:[%s5] sm:$0x3]
    %v145 = vlaneseq
    %v146 = vshrl.u32 %v145, 7
    %v147 = vsub.s32 0, %v146
    %v148 = vrot.slane %v143, %v147
    %v149 = vlaneseq
    %v150 = vshrl.u32 %v149, 7
    %v151 = vsub.s32 1, %v150
    %v152 = vrot.slane %v143, %v151
    %v171 = vunpack.c.l.b16 %v127
    %v172 = vunpack.c.h.b16 %v127
    %v173 = vunpack.c.l.b16 %v128
    %v174 = vunpack.c.h.b16 %v128
    %v175 = vunpack.c.l.b16 %v129
    %v176 = vunpack.c.h.b16 %v129
    %v177 = vunpack.c.l.b16 %v130
    %v178 = vunpack.c.h.b16 %v130
    %v179 = vunpack.c.l.b16 %v131
    %v180 = vunpack.c.h.b16 %v131
    %v181 = vunpack.c.l.b16 %v132
    %v182 = vunpack.c.h.b16 %v132
    %v183 = vunpack.c.l.b16 %v133
    %v184 = vunpack.c.h.b16 %v133
    %v185 = vunpack.c.l.b16 %v134
    %v186 = vunpack.c.h.b16 %v134
    %v187 = vunpack.c.l.b16 %v135
    %v188 = vunpack.c.h.b16 %v135
    %v189 = vunpack.c.l.b16 %v136
    %v190 = vunpack.c.h.b16 %v136
    %v191 = vunpack.c.l.b16 %v137
    %v192 = vunpack.c.h.b16 %v137
    %v193 = vunpack.c.l.b16 %v138
    %v194 = vunpack.c.h.b16 %v138
    %v195 = vunpack.c.l.b16 %v139
    %v196 = vunpack.c.h.b16 %v139
    %v197 = vunpack.c.l.b16 %v140
    %v198 = vunpack.c.h.b16 %v140
    %v199 = vunpack.c.l.b16 %v141
    %v200 = vunpack.c.h.b16 %v141
    %v201 = vunpack.c.l.b16 %v142
    %v202 = vunpack.c.h.b16 %v142
    %v203 = vpack.c.b16 %v173, %v171
    %v204 = vpack.c.b16 %v174, %v172
    %v205 = vpack.c.b16 %v177, %v175
    %v206 = vpack.c.b16 %v178, %v176
    %v207 = vpack.c.b16 %v181, %v179
    %v208 = vpack.c.b16 %v182, %v180
    %v209 = vpack.c.b16 %v185, %v183
    %v210 = vpack.c.b16 %v186, %v184
    %v211 = vpack.c.b16 %v189, %v187
    %v212 = vpack.c.b16 %v190, %v188
    %v213 = vpack.c.b16 %v193, %v191
    %v214 = vpack.c.b16 %v194, %v192
    %v215 = vpack.c.b16 %v197, %v195
    %v216 = vpack.c.b16 %v198, %v196
    %v217 = vpack.c.b16 %v201, %v199
    %v218 = vpack.c.b16 %v202, %v200
    %235 = vmatprep.subr.bf16.mxu0 %v204
    %236 = vmatpush1.bf16.msra.mxu0 %v203
    %237 = vmatprep.subr.bf16.mxu0 %v206
    %238 = vmatpush1.bf16.msra.mxu0 %v205
    %239 = vmatprep.subr.bf16.mxu0 %v208
    %240 = vmatpush1.bf16.msra.mxu0 %v207
    %241 = vmatprep.subr.bf16.mxu0 %v210
    %242 = vmatpush1.bf16.msra.mxu0 %v209
    %243 = vmatprep.subr.bf16.mxu0 %v212
    %244 = vmatpush1.bf16.msra.mxu0 %v211
    %245 = vmatprep.subr.bf16.mxu0 %v214
    %246 = vmatpush1.bf16.msra.mxu0 %v213
    %247 = vmatprep.subr.bf16.mxu0 %v216
    %248 = vmatpush1.bf16.msra.mxu0 %v215
    %249 = vmatprep.subr.bf16.mxu0 %v218
    %250 = vmatpush1.bf16.msra.mxu0 %v217
    %251 = vmatprep.subr.bf16.mxu0 0
    %252 = vmatpush1.bf16.msra.mxu0 0
    %253 = vmatprep.subr.bf16.mxu0 0
    %254 = vmatpush1.bf16.msra.mxu0 0
    %255 = vmatprep.subr.bf16.mxu0 0
    %256 = vmatpush1.bf16.msra.mxu0 0
    %257 = vmatprep.subr.bf16.mxu0 0
    %258 = vmatpush1.bf16.msra.mxu0 0
    %259 = vmatprep.subr.bf16.mxu0 0
    %260 = vmatpush1.bf16.msra.mxu0 0
    %261 = vmatprep.subr.bf16.mxu0 0
    %262 = vmatpush1.bf16.msra.mxu0 0
    %263 = vmatprep.subr.bf16.mxu0 0
    %264 = vmatpush1.bf16.msra.mxu0 0
    %265 = vmatprep.subr.bf16.mxu0 0
    %266 = vmatpush1.bf16.msra.mxu0 0
    %267 = vmatprep.mubr.bf16.mxu0 0
    %268 = vmatmul.mubr.bf16.gmra.mrb[0].mxu0 %v126
    %v269 = vpop.f32.mrb[0].mxu0
    %v270 = vadd.f32 %v148, %v269
    %v271 = vpop.f32.mrb[0].mxu0
    %v272 = vadd.f32 %v152, %v271
    %v273 = vpop.f32.mrb[0].mxu0
    %v274 = vpop.f32.mrb[0].mxu0
    %275 = vdwg.mxu0
    %v276 = vmul.f32 %v272, 0.5
    %v277 = vmul.f32 %v276, 1.442695
    %v278 = vpow.pop %v277
    %v279 = vmul.f32 %v57, %v278
    %v280 = vadd.f32 %v270, %v279
    %v281 = vpack.c.bf16 %v280, %v280
    %v282 = vld [vmem:[%s6] sm:$0xf]
    %v283 = vld [vmem:[%s7] sm:$0x1]
    %v285 = vlaneseq
    %v286 = vshrl.u32 %v285, 7
    %v287 = vsub.s32 0, %v286
    %v288 = vrot.slane %v283, %v287
    %vm290 = vcmask 64512
    %v292 = vsel %vm290, %v281, 0
    %vm294 = vcmask 1043456
    %v296 = vsel %vm294, %v282, 0
    %298 = vmatprep.subr.bf16.mxu0 0
    %299 = vmatpush1.bf16.msra.mxu0 %v296
    %300 = vmatprep.subr.bf16.mxu0 0
    %301 = vmatpush1.bf16.msra.mxu0 0
    %302 = vmatprep.subr.bf16.mxu0 0
    %303 = vmatpush1.bf16.msra.mxu0 0
    %304 = vmatprep.subr.bf16.mxu0 0
    %305 = vmatpush1.bf16.msra.mxu0 0
    %306 = vmatprep.subr.bf16.mxu0 0
    %307 = vmatpush1.bf16.msra.mxu0 0
    %308 = vmatprep.subr.bf16.mxu0 0
    %309 = vmatpush1.bf16.msra.mxu0 0
    %310 = vmatprep.subr.bf16.mxu0 0
    %311 = vmatpush1.bf16.msra.mxu0 0
    %312 = vmatprep.subr.bf16.mxu0 0
    %313 = vmatpush1.bf16.msra.mxu0 0
    %314 = vmatprep.subr.bf16.mxu0 0
    %315 = vmatpush1.bf16.msra.mxu0 0
    %316 = vmatprep.subr.bf16.mxu0 0
    %317 = vmatpush1.bf16.msra.mxu0 0
    %318 = vmatprep.subr.bf16.mxu0 0
    %319 = vmatpush1.bf16.msra.mxu0 0
    %320 = vmatprep.subr.bf16.mxu0 0
    %321 = vmatpush1.bf16.msra.mxu0 0
    %322 = vmatprep.subr.bf16.mxu0 0
    %323 = vmatpush1.bf16.msra.mxu0 0
    %324 = vmatprep.subr.bf16.mxu0 0
    %325 = vmatpush1.bf16.msra.mxu0 0
    %326 = vmatprep.subr.bf16.mxu0 0
    %327 = vmatpush1.bf16.msra.mxu0 0
    %328 = vmatprep.subr.bf16.mxu0 0
    %329 = vmatpush1.bf16.msra.mxu0 0
    %330 = vmatprep.mubr.bf16.mxu0 0
    %331 = vmatmul.mubr.bf16.gmra.mrb[0].mxu0 %v292
    %v332 = vpop.f32.mrb[0].mxu0
    %v333 = vadd.f32 %v288, %v332
    %v334 = vpop.f32.mrb[0].mxu0
    %v335 = vpop.f32.mrb[0].mxu0
    %v336 = vpop.f32.mrb[0].mxu0
    %337 = vdwg.mxu0
    %v338 = vmax.f32 %v333, 0.0
    %v339 = vpack.c.bf16 %v338, %v338
    %v340 = vld [vmem:[%s8] sm:$0xf]
    %v341 = vld [vmem:[%s8 + $0x4] sm:$0xf]
    %v342 = vld [vmem:[%s8 + $0x8] sm:$0xf]
    %v343 = vld [vmem:[%s8 + $0xc] sm:$0xf]
    %v344 = vld [vmem:[%s8 + $0x10] sm:$0xf]
    %v345 = vld [vmem:[%s8 + $0x14] sm:$0xf]
    %v346 = vld [vmem:[%s8 + $0x18] sm:$0xf]
    %v347 = vld [vmem:[%s8 + $0x1c] sm:$0xf]
    %v348 = vld [vmem:[%s8 + $0x20] sm:$0xf]
    %v349 = vld [vmem:[%s8 + $0x24] sm:$0xf]
    %v350 = vld [vmem:[%s8 + $0x28] sm:$0xf]
    %v351 = vld [vmem:[%s8 + $0x2c] sm:$0xf]
    %v352 = vld [vmem:[%s8 + $0x30] sm:$0xf]
    %v353 = vld [vmem:[%s8 + $0x34] sm:$0xf]
    %v354 = vld [vmem:[%s8 + $0x38] sm:$0xf]
    %v355 = vld [vmem:[%s8 + $0x3c] sm:$0xf]
    %v356 = vld [vmem:[%s9] sm:$0x1]
    %v358 = vlaneseq
    %v359 = vshrl.u32 %v358, 7
    %v360 = vsub.s32 0, %v359
    %v361 = vrot.slane %v356, %v360
    %v379 = vunpack.c.l.b16 %v340
    %v380 = vunpack.c.l.b16 %v341
    %v381 = vunpack.c.l.b16 %v342
    %v382 = vunpack.c.l.b16 %v343
    %v383 = vunpack.c.l.b16 %v344
    %v384 = vunpack.c.l.b16 %v345
    %v385 = vunpack.c.l.b16 %v346
    %v386 = vunpack.c.l.b16 %v347
    %v387 = vunpack.c.l.b16 %v348
    %v388 = vunpack.c.l.b16 %v349
    %v389 = vunpack.c.l.b16 %v350
    %v390 = vunpack.c.l.b16 %v351
    %v391 = vunpack.c.l.b16 %v352
    %v392 = vunpack.c.l.b16 %v353
    %v393 = vunpack.c.l.b16 %v354
    %v394 = vunpack.c.l.b16 %v355
    %v395 = vpack.c.b16 %v380, %v379
    %v396 = vpack.c.b16 %v382, %v381
    %v397 = vpack.c.b16 %v384, %v383
    %v398 = vpack.c.b16 %v386, %v385
    %v399 = vpack.c.b16 %v388, %v387
    %v400 = vpack.c.b16 %v390, %v389
    %v401 = vpack.c.b16 %v392, %v391
    %v402 = vpack.c.b16 %v394, %v393
    %411 = vmatprep.subr.bf16.mxu0 0
    %412 = vmatpush1.bf16.msra.mxu0 %v395
    %413 = vmatprep.subr.bf16.mxu0 0
    %414 = vmatpush1.bf16.msra.mxu0 %v396
    %415 = vmatprep.subr.bf16.mxu0 0
    %416 = vmatpush1.bf16.msra.mxu0 %v397
    %417 = vmatprep.subr.bf16.mxu0 0
    %418 = vmatpush1.bf16.msra.mxu0 %v398
    %419 = vmatprep.subr.bf16.mxu0 0
    %420 = vmatpush1.bf16.msra.mxu0 %v399
    %421 = vmatprep.subr.bf16.mxu0 0
    %422 = vmatpush1.bf16.msra.mxu0 %v400
    %423 = vmatprep.subr.bf16.mxu0 0
    %424 = vmatpush1.bf16.msra.mxu0 %v401
    %425 = vmatprep.subr.bf16.mxu0 0
    %426 = vmatpush1.bf16.msra.mxu0 %v402
    %427 = vmatprep.subr.bf16.mxu0 0
    %428 = vmatpush1.bf16.msra.mxu0 0
    %429 = vmatprep.subr.bf16.mxu0 0
    %430 = vmatpush1.bf16.msra.mxu0 0
    %431 = vmatprep.subr.bf16.mxu0 0
    %432 = vmatpush1.bf16.msra.mxu0 0
    %433 = vmatprep.subr.bf16.mxu0 0
    %434 = vmatpush1.bf16.msra.mxu0 0
    %435 = vmatprep.subr.bf16.mxu0 0
    %436 = vmatpush1.bf16.msra.mxu0 0
    %437 = vmatprep.subr.bf16.mxu0 0
    %438 = vmatpush1.bf16.msra.mxu0 0
    %439 = vmatprep.subr.bf16.mxu0 0
    %440 = vmatpush1.bf16.msra.mxu0 0
    %441 = vmatprep.subr.bf16.mxu0 0
    %442 = vmatpush1.bf16.msra.mxu0 0
    %443 = vmatprep.mubr.bf16.mxu0 0
    %444 = vmatmul.mubr.bf16.gmra.mrb[0].mxu0 %v339
    %v445 = vpop.f32.mrb[0].mxu0
    %v446 = vadd.f32 %v361, %v445
    %v447 = vpop.f32.mrb[0].mxu0
    %v448 = vpop.f32.mrb[0].mxu0
    %v449 = vpop.f32.mrb[0].mxu0
    %450 = vdwg.mxu0
    %v451 = vtanh.pop %v446
    %452 = vst.msk [vmem:[#allocation5] sm:$0xff] %vm81, %v451
    %453 = vst.msk [vmem:[#allocation6] sm:$0xff] %vm290, %v270
    %454 = vst.msk [vmem:[#allocation8] sm:$0xff] %vm290, %v272
    // Predicated region
    $region46: #{tpu_custom_call.1} parent=1 // pred_check
      _
    $region47: #{tpu_custom_call.1} parent=1 // pred_check_branch
      %456 = sbr.rel (0) target = $region49
    $region48: #{tpu_custom_call.1} parent=1 // pred_region
      %s458 = ssub.s32 128, 128
      %459 = vsyncadd [#allocation4], %s458
      %s461 = sshll.u32 [#allocation5], 4
      %s462 = int_to_ptr.vmem [resolvable:$true] %s461
      %464 = dma.vmem_to_hbm [thread:$0]  %s462, 128, %s10, [#allocation4]
    $region49: #{tpu_custom_call.1} parent=1 // pred_fallthru
      _
    // Predicated region
    $region50: #{tpu_custom_call.1} parent=1 // pred_check
      _
    $region51: #{tpu_custom_call.1} parent=1 // pred_check_branch
      %466 = sbr.rel (0) target = $region53
    $region52: #{tpu_custom_call.1} parent=1 // pred_region
      %s468 = ssub.s32 128, 128
      %469 = vsyncadd [#allocation7], %s468
      %s471 = sshll.u32 [#allocation6], 4
      %s472 = int_to_ptr.vmem [resolvable:$true] %s471
      %474 = dma.vmem_to_hbm [thread:$0]  %s472, 128, %s11, [#allocation7]
    $region53: #{tpu_custom_call.1} parent=1 // pred_fallthru
      _
    // Predicated region
    $region54: #{tpu_custom_call.1} parent=1 // pred_check
      _
    $region55: #{tpu_custom_call.1} parent=1 // pred_check_branch
      %476 = sbr.rel (0) target = $region57
    $region56: #{tpu_custom_call.1} parent=1 // pred_region
      %s478 = ssub.s32 128, 128
      %479 = vsyncadd [#allocation7], %s478
      %s481 = sshll.u32 [#allocation8], 4
      %s482 = int_to_ptr.vmem [resolvable:$true] %s481
      %484 = dma.vmem_to_hbm [thread:$0]  %s482, 128, %s12, [#allocation7]
    $region57: #{tpu_custom_call.1} parent=1 // pred_fallthru
      _
    // Predicated region
    $region58: #{tpu_custom_call.1} parent=1 // pred_check
      _
    $region59: #{tpu_custom_call.1} parent=1 // pred_check_branch
      %486 = sbr.rel (0) target = $region61
    $region60: #{tpu_custom_call.1} parent=1 // pred_region
      %487 = dma.done [#allocation4], 128
    $region61: #{tpu_custom_call.1} parent=1 // pred_fallthru
      _
    // Predicated region
    $region62: #{tpu_custom_call.1} parent=1 // pred_check
      _
    $region63: #{tpu_custom_call.1} parent=1 // pred_check_branch
      %489 = sbr.rel (0) target = $region65
    $region64: #{tpu_custom_call.1} parent=1 // pred_region
      %490 = dma.done [#allocation7], 128
    $region65: #{tpu_custom_call.1} parent=1 // pred_fallthru
      _
    // Predicated region
    $region66: #{tpu_custom_call.1} parent=1 // pred_check
      _
    $region67: #{tpu_custom_call.1} parent=1 // pred_check_branch
      %492 = sbr.rel (0) target = $region69
    $region68: #{tpu_custom_call.1} parent=1 // pred_region
      %493 = dma.done [#allocation7], 128
    $region69: #{tpu_custom_call.1} parent=1 // pred_fallthru
      _
    %494 = vsyncpa [#allocation3], 1
    %495 = vsyncpa [#allocation4], 1
    %496 = vsyncpa [#allocation7], 1

</llo_original>
